<compile_context>
chip_gen: v5e
topology: v5e:2x2
jax: 0.10.0
libtpu: 0.0.40
codegen_flags: <defaults>
</compile_context>

<pallas_src>
import functools

import jax
import jax.numpy as jnp
from jax.experimental import pallas as pl
from jax.experimental.pallas import tpu as pltpu


# ---------------------------------------------------------------------------
# Pallas kernel: row-wise argmax over the class axis.
# ---------------------------------------------------------------------------
def _row_argmax_kernel(s_ref, idx_ref):
    s = s_ref[...]                                          # (tb, C) block in VMEM
    m = jnp.max(s, axis=-1, keepdims=True)                  # (tb, 1) row max
    it = jax.lax.broadcasted_iota(jnp.int32, s.shape, 1)    # class indices
    big = jnp.iinfo(jnp.int32).max
    # first index attaining the max (matches torch.argmax tie-breaking)
    idx_ref[...] = jnp.min(jnp.where(s == m, it, big), axis=-1, keepdims=True)


_SUBLANE = {4: 8, 2: 16, 1: 32}      # sublane packing: f32 / bf16 / int8


def _choose_block_rows(batch, num_classes, itemsize,
                       target_block_bytes=2 * 1024 * 1024):
    """Row tile: ~2 MiB per input block, rounded to the dtype sublane multiple."""
    sub = _SUBLANE.get(itemsize, 8)
    rows = target_block_bytes // max(1, num_classes * itemsize)
    rows = max(sub, (rows // sub) * sub)
    if rows >= batch:
        return batch                 # single block; full-dim satisfies the (8,128) rule
    return rows


def row_argmax(s, *, block_rows=None, vmem_limit_bytes=32 * 1024 * 1024):
    """Per-row argmax of s (B, C) -> int32 indices (B,), computed in Pallas."""
    B, C = s.shape
    tb = _choose_block_rows(B, C, s.dtype.itemsize) if block_rows is None else block_rows
    idx = pl.pallas_call(
        _row_argmax_kernel,
        out_shape=jax.ShapeDtypeStruct((B, 1), jnp.int32),
        grid=(pl.cdiv(B, tb),),
        in_specs=[pl.BlockSpec((tb, C), lambda i: (i, 0))],
        out_specs=pl.BlockSpec((tb, 1), lambda i: (i, 0)),
        compiler_params=pltpu.CompilerParams(
            dimension_semantics=("parallel",),
            vmem_limit_bytes=vmem_limit_bytes),
    )(s)
    return idx[:, 0]


# ---------------------------------------------------------------------------
# Plain-JAX stand-ins for the external encoder / decoder modules.
# TODO(synk): encoder/decoder are arbitrary external nn.Modules in the spec;
# they are implemented as simple linear layers here (not kernelized).
# ---------------------------------------------------------------------------
def linear_encoder(params, X):
    return X @ params["W"] + params["b"]


def linear_decoder(params, X, z_idx):
    # one_hot(z_idx) @ W_z fused as a row gather of W_z (perf-review item (a)).
    return X @ params["W_x"] + jnp.take(params["W_z"], z_idx, axis=0) + params["b"]


def softmax_xent(logits, labels):
    logp = jax.nn.log_softmax(logits, axis=-1)
    return -jnp.mean(jnp.take_along_axis(logp, labels[:, None], axis=-1))


class RewardStats:
    def __init__(self, avg=0.0, std=1.0):
        self.avg, self.std = avg, std

    def update(self, avg, std):
        self.avg, self.std = avg, std


# ---------------------------------------------------------------------------
# JAX mirror of the PyTorch nn.Module.
# ---------------------------------------------------------------------------
class REINFORCEClassifier:

    def __init__(self, encoder, decoder, use_baseline):
        self.encoder = encoder
        self.decoder = decoder
        self.use_baseline = use_baseline
        self.train = True

    def set_train(self):
        self.train = True

    def set_eval(self):
        self.train = False

    def __call__(self, *args, **kwargs):
        return self.forward(*args, **kwargs)

    def forward(self, X, y, loss_function=None, reward_stats=None, rng=None):
        s = self.encoder(X)
        if self.train:
            # torch.multinomial(softmax(s), 1) == argmax(s + Gumbel noise).
            # TODO(synk): the Gumbel noise is drawn with jax.random in the
            # wrapper rather than with the in-kernel pltpu PRNG.
            g = jax.random.gumbel(rng, s.shape, dtype=s.dtype)
            sample = row_argmax(s + g)                      # Pallas kernel
            y_hat = self.decoder(X, sample)                 # one-hot fused as gather
            loss = loss_function(y_hat, y)
            reward = self.get_reinforce_reward(loss, reward_stats, self.use_baseline)
            # (reward * (s * one_hot(sample))).mean() over the full (B, C) tensor:
            sel = jnp.take_along_axis(s, sample[:, None], axis=-1)
            total_loss = loss - reward * jnp.sum(sel) / s.size
            return total_loss, sample
        else:
            idx = row_argmax(s)                             # Pallas kernel
            y_hat = self.decoder(X, idx)                    # one-hot fused as gather
            return y_hat, idx

    def get_reinforce_reward(self, logp, reward_stats, use_baseline=True):
        reward = logp
        if not use_baseline:
            r_avg, r_std = float(reward.mean()), float(reward.std())
            reward = (reward - reward_stats.avg) / reward_stats.std
            reward_stats.update(r_avg, r_std)
        return jax.lax.stop_gradient(reward)


if __name__ == "__main__":
    key = jax.random.PRNGKey(0)
    k_x, k_we, k_be, k_wx, k_wz, k_b, k_g, k_big = jax.random.split(key, 8)

    B, D, C, K = 16, 32, 16, 2      # batch, features, latent classes, output classes
    X = jax.random.normal(k_x, (B, D), dtype=jnp.float32)
    y = jnp.arange(B, dtype=jnp.int32) % K

    enc_params = {"W": jax.random.normal(k_we, (D, C), jnp.float32) * 0.1,
                  "b": jax.random.normal(k_be, (C,), jnp.float32) * 0.1}
    dec_params = {"W_x": jax.random.normal(k_wx, (D, K), jnp.float32) * 0.1,
                  "W_z": jax.random.normal(k_wz, (C, K), jnp.float32) * 0.1,
                  "b": jax.random.normal(k_b, (K,), jnp.float32) * 0.1}

    encoder = functools.partial(linear_encoder, enc_params)
    decoder = functools.partial(linear_decoder, dec_params)

    model = REINFORCEClassifier(encoder, decoder, use_baseline=True)

    # ---- eval path ----------------------------------------------------------
    model.set_eval()
    y_hat, idx = model.forward(X, y)
    y_hat, idx = jax.block_until_ready((y_hat, idx))

    s_ref = X @ enc_params["W"] + enc_params["b"]
    idx_ref = jnp.argmax(s_ref, axis=-1)
    z_ref = jax.nn.one_hot(idx_ref, C, dtype=jnp.float32)
    y_hat_ref = X @ dec_params["W_x"] + z_ref @ dec_params["W_z"] + dec_params["b"]
    assert idx.shape == (B,) and idx.dtype == jnp.int32
    assert bool(jnp.all(idx == idx_ref))
    assert bool(jnp.allclose(y_hat, y_hat_ref, atol=1e-5, rtol=1e-5))

    # ---- train path ---------------------------------------------------------
    model.set_train()
    total_loss, sample = model.forward(X, y, loss_function=softmax_xent,
                                       reward_stats=RewardStats(), rng=k_g)
    total_loss, sample = jax.block_until_ready((total_loss, sample))

    g = jax.random.gumbel(k_g, s_ref.shape, dtype=s_ref.dtype)
    sample_ref = jnp.argmax(s_ref + g, axis=-1)
    assert bool(jnp.all(sample == sample_ref))
    assert bool(jnp.isfinite(total_loss))

    # ---- larger score matrix: exercises multi-step grid + partial tail block
    S_big = jax.random.normal(k_big, (2000, 512), dtype=jnp.float32)
    idx_big = jax.block_until_ready(row_argmax(S_big))
    assert bool(jnp.all(idx_big == jnp.argmax(S_big, axis=-1)))

    print("KERNEL_OK")
</pallas_src>

<mosaic_0001>
module attributes {stable_mosaic.version = 11 : i64} {
  func.func @_row_argmax_kernel(%arg0: i32, %arg1: memref<16x16xf32, #tpu.memory_space<vmem>>, %arg2: memref<16x1xi32, #tpu.memory_space<vmem>>) attributes {dimension_semantics = [#tpu.dimension_semantics<parallel>], iteration_bounds = array<i64: 1>, scalar_prefetch = 0 : i64, scratch_operands = 0 : i64, tpu.core_type = #tpu.core_type<tc>, window_params = [{transform_indices = @transform_0, window_bounds = array<i64: 16, 16>}, {transform_indices = @transform_1, window_bounds = array<i64: 16, 1>}]} {
    %c0 = arith.constant 0 : index
    %c0_0 = arith.constant 0 : index
    %0 = vector.load %arg1[%c0, %c0_0] : memref<16x16xf32, #tpu.memory_space<vmem>>, vector<16x16xf32>
    %cst = arith.constant dense<0xFF800000> : vector<16xf32>
    %1 = vector.multi_reduction <maximumf>, %0, %cst [1] : vector<16x16xf32> to vector<16xf32>
    %2 = vector.shape_cast %1 : vector<16xf32> to vector<16x1xf32>
    %3 = tpu.iota {dimensions = array<i32: 1>} : vector<16x16xi32>
    %4 = vector.broadcast %2 : vector<16x1xf32> to vector<16x16xf32>
    %5 = arith.cmpf oeq, %0, %4 : vector<16x16xf32>
    %c2147483647_i32 = arith.constant 2147483647 : i32
    %6 = vector.broadcast %c2147483647_i32 : i32 to vector<16x16xi32>
    %7 = arith.select %5, %3, %6 : vector<16x16xi1>, vector<16x16xi32>
    %cst_1 = arith.constant dense<2147483647> : vector<16xi32>
    %8 = vector.multi_reduction <minsi>, %7, %cst_1 [1] : vector<16x16xi32> to vector<16xi32>
    %9 = vector.shape_cast %8 : vector<16xi32> to vector<16x1xi32>
    %c0_2 = arith.constant 0 : index
    %c0_3 = arith.constant 0 : index
    %10 = vector.load %arg2[%c0_2, %c0_3] : memref<16x1xi32, #tpu.memory_space<vmem>>, vector<16x1xi32>
    tpu.vector_store %arg2[%c0_2, %c0_3], %9 {strides = array<i32>} : memref<16x1xi32, #tpu.memory_space<vmem>>, vector<16x1xi32>,
    return
  }
  func.func @transform_0(%arg0: i32) -> (i32, i32) {
    %c0_i32 = arith.constant 0 : i32
    %c0_i32_0 = arith.constant 0 : i32
    return %arg0, %c0_i32 : i32, i32
  }
  func.func @transform_1(%arg0: i32) -> (i32, i32) {
    %c0_i32 = arith.constant 0 : i32
    %c0_i32_0 = arith.constant 0 : i32
    return %arg0, %c0_i32 : i32, i32
  }
}

</mosaic_0001>

<llo_original>
// kernel: tpu_custom_call.1
$region0: #{tpu_custom_call.1}
  #allocation0 [shape = 'u32[]', space=smem, size = 0x4, offset = 0x4, fixed_abs, tag = 'smem constant byte address 0x4 - core index']
  #allocation1 [shape = 'u32[72,128]{1,0:T(1,128)}', space=vmem, size = 0x9000, scoped, tag = 'internal scratch']
  %s0 = inlined_call_operand.hbm [shape: f32[16,16], index: 0, kind: input, shape index: {}]
  %s1 = inlined_call_operand.vmem [shape: s32[16,1], index: 1, kind: output, shape index: {}]
  %s2 = sld [smem:[#allocation0]]
  $region18: #{tpu_custom_call.1} parent=0
    _
  %s4 = ssub.s32 1, %s2
  %s5 = scalar_select 0, %s4, %s2
  $region1: #{tpu_custom_call.1} parent=0
    #allocation2 [shape = 'u8[8192]{0}', space=vmem, size = 0x2000, scoped, tag = 'input window, operand 0, single buffered']
    #allocation3 [shape = 's32[1]{0}', space=sflag, size = 0x4, scoped, tag = 'scoped memory for tpu_custom_call.1']
    %6 = vsyncpa [#allocation3], 0
    // Predicated region
    $region2: #{tpu_custom_call.1} parent=1 // pred_check
      _
    $region3: #{tpu_custom_call.1} parent=1 // pred_check_branch
      %8 = sbr.rel (0) target = $region5
    $region4: #{tpu_custom_call.1} parent=1 // pred_region
      %10 = vsyncadd [#allocation3], 0
      %s11 = sshll.u32 %s0, 4
      %s12 = int_to_ptr.hbm [resolvable:$true] %s11
      %s13 = sshll.u32 [#allocation2], 4
      %s14 = int_to_ptr.vmem [resolvable:$true] %s13
      %19 = dma.hbm_to_vmem [thread:$0]  %s12, 256, %s14, [#allocation3], 128, 128, 8
    $region5: #{tpu_custom_call.1} parent=1 // pred_fallthru
      _
    // Predicated region
    $region6: #{tpu_custom_call.1} parent=1 // pred_check
      _
    $region7: #{tpu_custom_call.1} parent=1 // pred_check_branch
      %21 = sbr.rel (0) target = $region9
    $region8: #{tpu_custom_call.1} parent=1 // pred_region
      %23 = dma.done [#allocation3], 256
    $region9: #{tpu_custom_call.1} parent=1 // pred_fallthru
      _
    %v24 = vld [vmem:[#allocation2] sm:$0xff]
    %v25 = vld [vmem:[#allocation2 + $0x8] sm:$0xff]
    %vm26 = vcmask 130048
    %v27 = vsel %vm26, %v24, -inf
    %28 = vmax.xlane.f32.xlu0 %v27
    %v29 = vpop.xlane.xlu0 %28
    %v30 = vsel %vm26, %v25, -inf
    %31 = vmax.xlane.f32.xlu0 %v30
    %v32 = vpop.xlane.xlu0 %31
    %v33 = vlaneseq
    %v34 = vand.u32 %v33, 127
    %vm35 = vcmp.eq.f32.partialorder %v24, %v29
    %vm36 = vcmp.eq.f32.partialorder %v25, %v32
    %v37 = vsel %vm35, %v34, 2147483647
    %v38 = vsel %vm36, %v34, 2147483647
    %v39 = vsel %vm26, %v37, 2147483647
    %v40 = vand.u32 %v39, 65535
    %v41 = vshra.s32 %v39, 16
    %v42 = vcvt.s32.f32 %v40
    %v43 = vcvt.s32.f32 %v41
    %44 = vmin.xlane.f32.xlu0 %v43
    %v45 = vpop.xlane.xlu0 %44
    %vm46 = vcmp.eq.f32.partialorder %v43, %v45
    %v47 = vsel %vm46, %v42, inf
    %48 = vmin.xlane.f32.xlu0 %v47
    %v49 = vpop.xlane.xlu0 %48
    %v50 = vcvt.f32.s32 %v49
    %v51 = vcvt.f32.s32 %v45
    %v52 = vshll.u32 %v51, 16
    %v53 = vadd.s32 %v52, %v50
    %v54 = vsel %vm26, %v38, 2147483647
    %v55 = vand.u32 %v54, 65535
    %v56 = vshra.s32 %v54, 16
    %v57 = vcvt.s32.f32 %v55
    %v58 = vcvt.s32.f32 %v56
    %59 = vmin.xlane.f32.xlu0 %v58
    %v60 = vpop.xlane.xlu0 %59
    %vm61 = vcmp.eq.f32.partialorder %v58, %v60
    %v62 = vsel %vm61, %v57, inf
    %63 = vmin.xlane.f32.xlu0 %v62
    %v64 = vpop.xlane.xlu0 %63
    %v65 = vcvt.f32.s32 %v64
    %v66 = vcvt.f32.s32 %v60
    %v67 = vshll.u32 %v66, 16
    %v68 = vadd.s32 %v67, %v65
    %vm69 = vcmask 7168
    %70 = vst.msk [vmem:[%s1] sm:$0xff] %vm69, %v53
    %71 = vst.msk [vmem:[%s1 + $0x8] sm:$0xff] %vm69, %v68
    // Predicated region
    $region10: #{tpu_custom_call.1} parent=1 // pred_check
      _
    $region11: #{tpu_custom_call.1} parent=1 // pred_check_branch
      %73 = sbr.rel (0) target = $region13
    $region12: #{tpu_custom_call.1} parent=1 // pred_region
      _
    $region13: #{tpu_custom_call.1} parent=1 // pred_fallthru
      _
    // Predicated region
    $region14: #{tpu_custom_call.1} parent=1 // pred_check
      _
    $region15: #{tpu_custom_call.1} parent=1 // pred_check_branch
      %75 = sbr.rel (0) target = $region17
    $region16: #{tpu_custom_call.1} parent=1 // pred_region
      _
    $region17: #{tpu_custom_call.1} parent=1 // pred_fallthru
      _
    %76 = vsyncpa [#allocation3], 1

</llo_original>
